<compile_context>
chip_gen: v6e
topology: v6e:2x2x1
jax: 0.10.0
libtpu: 0.0.40
codegen_flags: <defaults>
</compile_context>

<pallas_src>
import functools
import math

import jax
import jax.numpy as jnp
from jax.experimental import pallas as pl
from jax.experimental.pallas import tpu as pltpu


def _cdiv(a, b):
    return -(-a // b)


def _overlap_add_kernel(x_ref, o_ref, *, chunk, step, regular):
    """Per-output-block overlap-add.

    x_ref: (S, T=chunk, C)  one batch element's chunk stack (resident across tiles)
    o_ref: (tile_rows, C)   this grid step's output tile
    """
    S = x_ref.shape[0]
    C = x_ref.shape[2]
    o_rows = o_ref.shape[0]
    R = _cdiv(chunk, step)            # max contributing chunks per output block
    bt = _cdiv(o_rows, step)          # step-blocks handled by this tile
    t = pl.program_id(1)              # time-tile index

    def compute_block(g):
        # g: global output-block index; covers output rows [g*step, g*step + step).
        acc = jnp.zeros((step, C), jnp.float32)
        for r in range(R):                              # static unroll, R is small
            s = g - r                                   # contributing chunk index
            valid = jnp.logical_and(s >= 0, s < S)
            s_c = jnp.clip(s, 0, S - 1)
            rows = min(step, chunk - r * step)          # static
            v = x_ref[s_c, pl.ds(r * step, rows), :].astype(jnp.float32)
            if rows < step:                             # only when chunk % step != 0
                v = jnp.concatenate(
                    [v, jnp.zeros((step - rows, C), jnp.float32)], axis=0)
            acc = acc + jnp.where(valid, v, 0.0)

        # Normalize by the overlap count (fold(x) / fold(ones) in the reference).
        s_max = jnp.minimum(g, S - 1)
        if regular:
            # Count is constant within a block -> cheap scalar multiply.
            cnt = s_max - jnp.maximum(g - R + 1, 0) + 1
            inv = 1.0 / jnp.maximum(cnt, 1).astype(jnp.float32)
        else:
            # Irregular overlap: per-row counts.  cnt == 0 -> inf -> 0*inf = NaN,
            # matching torch's fold(x)/fold(ones) = 0/0 for uncovered frames.
            i = jax.lax.broadcasted_iota(jnp.int32, (step, 1), 0)
            s_min = jnp.maximum(g + (i - chunk + step) // step, 0)   # ceil div
            cnt = s_max - s_min + 1
            inv = 1.0 / cnt.astype(jnp.float32)
        return (acc * inv).astype(o_ref.dtype)

    if o_rows % step == 0:
        # Main path: every block is a full (step, C) slab -> one store each.
        # (Stores are fully sublane-aligned when step % 8 == 0, as in the demo.)
        def body(j, carry):
            row0 = pl.multiple_of(j * step, step)
            o_ref[pl.ds(row0, step), :] = compute_block(t * bt + j)
            return carry

        jax.lax.fori_loop(0, bt, body, 0, unroll=True if bt <= 8 else 8)
    else:
        # Tiny-output fallback (single full-extent tile): static unroll and clip
        # the final partial block's store.
        for j in range(bt):
            rows_j = min(step, o_rows - j * step)
            o_ref[j * step:j * step + rows_j, :] = compute_block(t * bt + j)[:rows_j]


def _pick_time_tiling(out_len, step, C, itemsize):
    """Choose (tile_rows, num_tiles) for the output time axis."""
    num_blocks = _cdiv(out_len, step)
    align = 8 // math.gcd(step, 8)                  # blocks/tile so tile_rows % 8 == 0
    max_bt = (out_len // step) // align * align     # largest aligned bt, bt*step <= out_len
    if max_bt < align:
        return out_len, 1                           # tiny output: one full-extent tile
    # ~512 KiB output tile: large per-step payload without threatening VMEM.
    target_rows = max(step * align, (512 * 1024) // max(1, C * itemsize))
    bt = min(max_bt, max(align, (target_rows // (step * align)) * align))
    # Prefer >= 2 time tiles so output writeback pipelines even when B is tiny.
    if _cdiv(num_blocks, bt) < 2 and num_blocks > align:
        half = max(align, (_cdiv(num_blocks, 2) // align) * align)
        bt = min(bt, half)
    return bt * step, _cdiv(num_blocks, bt)


def overlapped_add(x, *, chunk_size, step_size, orig_seq_len=None):
    """x: (B, S, T, C) with T == chunk_size -> (B, min(seq_len, orig_seq_len), C)."""
    B, S, T, C = x.shape
    assert T == chunk_size, "chunk axis (T) must equal chunk_size"

    if chunk_size == step_size:
        # Non-overlapping case is a pure reshape; no compute, no kernel needed.
        return x.reshape(B, S * T, C)[:, :orig_seq_len]

    seq_len = chunk_size + step_size * (S - 1)
    out_len = seq_len if orig_seq_len is None else min(orig_seq_len, seq_len)
    itemsize = jnp.dtype(x.dtype).itemsize
    tile_rows, num_tiles = _pick_time_tiling(out_len, step_size, C, itemsize)

    kernel = functools.partial(
        _overlap_add_kernel, chunk=chunk_size, step=step_size,
        regular=(chunk_size % step_size == 0))

    # Raise the scoped-VMEM limit only when the double-buffered blocks need it.
    vmem_kw = {}
    vmem_est = 2 * (S * T * C + tile_rows * C) * itemsize + (2 << 20)
    if vmem_est > (16 << 20):
        vmem_kw["vmem_limit_bytes"] = vmem_est

    # TODO(synk): for production S*T*C too large for a resident per-batch slab on
    # v7x (64 MiB VMEM), tile the chunk (S) axis with a (chunk-step)-row halo via
    # manual DMA (memory_space=pl.ANY); likewise block several batch elements per
    # grid step when B is large and the per-batch work is tiny.
    return pl.pallas_call(
        kernel,
        out_shape=jax.ShapeDtypeStruct((B, out_len, C), x.dtype),
        grid=(B, num_tiles),
        in_specs=[pl.BlockSpec((None, S, T, C), lambda b, t: (b, 0, 0, 0))],
        out_specs=pl.BlockSpec((None, tile_rows, C), lambda b, t: (b, t, 0)),
        compiler_params=pltpu.CompilerParams(
            dimension_semantics=("parallel", "parallel"), **vmem_kw),
    )(x)


if __name__ == "__main__":
    # Module config (deterministic, synthetic)
    chunk_size, step_size = 16, 8          # 50% overlap (regular case)
    B, S, C = 2, 8, 128                    # C = 128 -> lane-dense output
    T = chunk_size
    seq_len = chunk_size + step_size * (S - 1)   # 72
    orig_seq_len = seq_len - 2                   # 70, exercises in-kernel truncation

    key = jax.random.PRNGKey(0)
    x = jax.random.normal(key, (B, S, T, C), dtype=jnp.float32)

    out = overlapped_add(x, chunk_size=chunk_size, step_size=step_size,
                         orig_seq_len=orig_seq_len)
    out = jax.block_until_ready(out)

    # Pure-JAX reference mirroring fold(x) / fold(ones) in the PyTorch module.
    acc = jnp.zeros((B, seq_len, C), jnp.float32)
    cnt = jnp.zeros((B, seq_len, 1), jnp.float32)
    for s in range(S):
        sl = slice(s * step_size, s * step_size + chunk_size)
        acc = acc.at[:, sl, :].add(x[:, s])
        cnt = cnt.at[:, sl, :].add(1.0)
    ref = (acc / cnt)[:, :orig_seq_len]

    assert out.shape == (B, orig_seq_len, C)
    assert jnp.allclose(out, ref, atol=1e-6, rtol=1e-5), float(jnp.max(jnp.abs(out - ref)))

    print("KERNEL_OK")
</pallas_src>

<mosaic_0001>
module attributes {stable_mosaic.version = 11 : i64} {
  func.func @_overlap_add_kernel(%arg0: i32, %arg1: i32, %arg2: memref<1x8x16x128xf32, #tpu.memory_space<vmem>>, %arg3: memref<1x64x128xf32, #tpu.memory_space<vmem>>) attributes {dimension_semantics = [#tpu.dimension_semantics<parallel>, #tpu.dimension_semantics<parallel>], iteration_bounds = array<i64: 2, 2>, scalar_prefetch = 0 : i64, scratch_operands = 0 : i64, tpu.core_type = #tpu.core_type<tc>, window_params = [{transform_indices = @transform_0, window_bounds = array<i64: 1, 8, 16, 128>}, {transform_indices = @transform_1, window_bounds = array<i64: 1, 64, 128>}]} {
    %c0_i32 = arith.constant 0 : i32
    %c8_i32 = arith.constant 8 : i32
    %0 = arith.muli %c0_i32, %c8_i32 : i32
    %1 = tpu.assume_multiple %0, 8 : i32
    %c8_i32_0 = arith.constant 8 : i32
    %2 = arith.muli %arg1, %c8_i32_0 : i32
    %3 = arith.addi %2, %c0_i32 : i32
    %cst = arith.constant 0.000000e+00 : f32
    %4 = vector.broadcast %cst : f32 to vector<8x128xf32>
    %c0_i32_1 = arith.constant 0 : i32
    %5 = arith.subi %3, %c0_i32_1 : i32
    %c0_i32_2 = arith.constant 0 : i32
    %6 = arith.cmpi sge, %5, %c0_i32_2 : i32
    %c8_i32_3 = arith.constant 8 : i32
    %7 = arith.cmpi slt, %5, %c8_i32_3 : i32
    %8 = arith.andi %6, %7 : i1
    %c0_i32_4 = arith.constant 0 : i32
    %c7_i32 = arith.constant 7 : i32
    %9 = arith.maxsi %c0_i32_4, %5 : i32
    %10 = arith.minsi %c7_i32, %9 : i32
    %c0 = arith.constant 0 : index
    %11 = arith.index_cast %10 : i32 to index
    %c0_5 = arith.constant 0 : index
    %c0_6 = arith.constant 0 : index
    %12 = vector.load %arg2[%c0, %11, %c0_5, %c0_6] : memref<1x8x16x128xf32, #tpu.memory_space<vmem>>, vector<1x1x8x128xf32>
    %13 = vector.shape_cast %12 : vector<1x1x8x128xf32> to vector<8x128xf32>
    %cst_7 = arith.constant 0.000000e+00 : f32
    %14 = vector.broadcast %cst_7 : f32 to vector<8x128xf32>
    %15 = arith.select %8, %13, %14 : vector<8x128xf32>
    %16 = arith.addf %4, %15 : vector<8x128xf32>
    %c1_i32 = arith.constant 1 : i32
    %17 = arith.subi %3, %c1_i32 : i32
    %c0_i32_8 = arith.constant 0 : i32
    %18 = arith.cmpi sge, %17, %c0_i32_8 : i32
    %c8_i32_9 = arith.constant 8 : i32
    %19 = arith.cmpi slt, %17, %c8_i32_9 : i32
    %20 = arith.andi %18, %19 : i1
    %c0_i32_10 = arith.constant 0 : i32
    %c7_i32_11 = arith.constant 7 : i32
    %21 = arith.maxsi %c0_i32_10, %17 : i32
    %22 = arith.minsi %c7_i32_11, %21 : i32
    %c0_12 = arith.constant 0 : index
    %23 = arith.index_cast %22 : i32 to index
    %c8 = arith.constant 8 : index
    %c0_13 = arith.constant 0 : index
    %24 = vector.load %arg2[%c0_12, %23, %c8, %c0_13] : memref<1x8x16x128xf32, #tpu.memory_space<vmem>>, vector<1x1x8x128xf32>
    %25 = vector.shape_cast %24 : vector<1x1x8x128xf32> to vector<8x128xf32>
    %cst_14 = arith.constant 0.000000e+00 : f32
    %26 = vector.broadcast %cst_14 : f32 to vector<8x128xf32>
    %27 = arith.select %20, %25, %26 : vector<8x128xf32>
    %28 = arith.addf %16, %27 : vector<8x128xf32>
    %c7_i32_15 = arith.constant 7 : i32
    %29 = arith.minsi %3, %c7_i32_15 : i32
    %c2_i32 = arith.constant 2 : i32
    %30 = arith.subi %3, %c2_i32 : i32
    %c1_i32_16 = arith.constant 1 : i32
    %31 = arith.addi %30, %c1_i32_16 : i32
    %c0_i32_17 = arith.constant 0 : i32
    %32 = arith.maxsi %31, %c0_i32_17 : i32
    %33 = arith.subi %29, %32 : i32
    %c1_i32_18 = arith.constant 1 : i32
    %34 = arith.addi %33, %c1_i32_18 : i32
    %c1_i32_19 = arith.constant 1 : i32
    %35 = arith.maxsi %34, %c1_i32_19 : i32
    %36 = arith.sitofp %35 : i32 to f32
    %cst_20 = arith.constant 1.000000e+00 : f32
    %37 = arith.divf %cst_20, %36 : f32
    %38 = vector.broadcast %37 : f32 to vector<8x128xf32>
    %39 = arith.mulf %28, %38 : vector<8x128xf32>
    %c0_21 = arith.constant 0 : index
    %40 = arith.index_cast %1 : i32 to index
    %c0_22 = arith.constant 0 : index
    %41 = vector.load %arg3[%c0_21, %40, %c0_22] : memref<1x64x128xf32, #tpu.memory_space<vmem>>, vector<1x8x128xf32>
    %42 = vector.shape_cast %41 : vector<1x8x128xf32> to vector<8x128xf32>
    %43 = vector.shape_cast %39 : vector<8x128xf32> to vector<1x8x128xf32>
    tpu.vector_store %arg3[%c0_21, %40, %c0_22], %43 {strides = array<i32>} : memref<1x64x128xf32, #tpu.memory_space<vmem>>, vector<1x8x128xf32>,
    %c1_i32_23 = arith.constant 1 : i32
    %c8_i32_24 = arith.constant 8 : i32
    %44 = arith.muli %c1_i32_23, %c8_i32_24 : i32
    %45 = tpu.assume_multiple %44, 8 : i32
    %c8_i32_25 = arith.constant 8 : i32
    %46 = arith.muli %arg1, %c8_i32_25 : i32
    %47 = arith.addi %46, %c1_i32_23 : i32
    %cst_26 = arith.constant 0.000000e+00 : f32
    %48 = vector.broadcast %cst_26 : f32 to vector<8x128xf32>
    %c0_i32_27 = arith.constant 0 : i32
    %49 = arith.subi %47, %c0_i32_27 : i32
    %c0_i32_28 = arith.constant 0 : i32
    %50 = arith.cmpi sge, %49, %c0_i32_28 : i32
    %c8_i32_29 = arith.constant 8 : i32
    %51 = arith.cmpi slt, %49, %c8_i32_29 : i32
    %52 = arith.andi %50, %51 : i1
    %c0_i32_30 = arith.constant 0 : i32
    %c7_i32_31 = arith.constant 7 : i32
    %53 = arith.maxsi %c0_i32_30, %49 : i32
    %54 = arith.minsi %c7_i32_31, %53 : i32
    %c0_32 = arith.constant 0 : index
    %55 = arith.index_cast %54 : i32 to index
    %c0_33 = arith.constant 0 : index
    %c0_34 = arith.constant 0 : index
    %56 = vector.load %arg2[%c0_32, %55, %c0_33, %c0_34] : memref<1x8x16x128xf32, #tpu.memory_space<vmem>>, vector<1x1x8x128xf32>
    %57 = vector.shape_cast %56 : vector<1x1x8x128xf32> to vector<8x128xf32>
    %cst_35 = arith.constant 0.000000e+00 : f32
    %58 = vector.broadcast %cst_35 : f32 to vector<8x128xf32>
    %59 = arith.select %52, %57, %58 : vector<8x128xf32>
    %60 = arith.addf %48, %59 : vector<8x128xf32>
    %c1_i32_36 = arith.constant 1 : i32
    %61 = arith.subi %47, %c1_i32_36 : i32
    %c0_i32_37 = arith.constant 0 : i32
    %62 = arith.cmpi sge, %61, %c0_i32_37 : i32
    %c8_i32_38 = arith.constant 8 : i32
    %63 = arith.cmpi slt, %61, %c8_i32_38 : i32
    %64 = arith.andi %62, %63 : i1
    %c0_i32_39 = arith.constant 0 : i32
    %c7_i32_40 = arith.constant 7 : i32
    %65 = arith.maxsi %c0_i32_39, %61 : i32
    %66 = arith.minsi %c7_i32_40, %65 : i32
    %c0_41 = arith.constant 0 : index
    %67 = arith.index_cast %66 : i32 to index
    %c8_42 = arith.constant 8 : index
    %c0_43 = arith.constant 0 : index
    %68 = vector.load %arg2[%c0_41, %67, %c8_42, %c0_43] : memref<1x8x16x128xf32, #tpu.memory_space<vmem>>, vector<1x1x8x128xf32>
    %69 = vector.shape_cast %68 : vector<1x1x8x128xf32> to vector<8x128xf32>
    %cst_44 = arith.constant 0.000000e+00 : f32
    %70 = vector.broadcast %cst_44 : f32 to vector<8x128xf32>
    %71 = arith.select %64, %69, %70 : vector<8x128xf32>
    %72 = arith.addf %60, %71 : vector<8x128xf32>
    %c7_i32_45 = arith.constant 7 : i32
    %73 = arith.minsi %47, %c7_i32_45 : i32
    %c2_i32_46 = arith.constant 2 : i32
    %74 = arith.subi %47, %c2_i32_46 : i32
    %c1_i32_47 = arith.constant 1 : i32
    %75 = arith.addi %74, %c1_i32_47 : i32
    %c0_i32_48 = arith.constant 0 : i32
    %76 = arith.maxsi %75, %c0_i32_48 : i32
    %77 = arith.subi %73, %76 : i32
    %c1_i32_49 = arith.constant 1 : i32
    %78 = arith.addi %77, %c1_i32_49 : i32
    %c1_i32_50 = arith.constant 1 : i32
    %79 = arith.maxsi %78, %c1_i32_50 : i32
    %80 = arith.sitofp %79 : i32 to f32
    %cst_51 = arith.constant 1.000000e+00 : f32
    %81 = arith.divf %cst_51, %80 : f32
    %82 = vector.broadcast %81 : f32 to vector<8x128xf32>
    %83 = arith.mulf %72, %82 : vector<8x128xf32>
    %c0_52 = arith.constant 0 : index
    %84 = arith.index_cast %45 : i32 to index
    %c0_53 = arith.constant 0 : index
    %85 = vector.load %arg3[%c0_52, %84, %c0_53] : memref<1x64x128xf32, #tpu.memory_space<vmem>>, vector<1x8x128xf32>
    %86 = vector.shape_cast %85 : vector<1x8x128xf32> to vector<8x128xf32>
    %87 = vector.shape_cast %83 : vector<8x128xf32> to vector<1x8x128xf32>
    tpu.vector_store %arg3[%c0_52, %84, %c0_53], %87 {strides = array<i32>} : memref<1x64x128xf32, #tpu.memory_space<vmem>>, vector<1x8x128xf32>,
    %c2_i32_54 = arith.constant 2 : i32
    %c8_i32_55 = arith.constant 8 : i32
    %88 = arith.muli %c2_i32_54, %c8_i32_55 : i32
    %89 = tpu.assume_multiple %88, 8 : i32
    %c8_i32_56 = arith.constant 8 : i32
    %90 = arith.muli %arg1, %c8_i32_56 : i32
    %91 = arith.addi %90, %c2_i32_54 : i32
    %cst_57 = arith.constant 0.000000e+00 : f32
    %92 = vector.broadcast %cst_57 : f32 to vector<8x128xf32>
    %c0_i32_58 = arith.constant 0 : i32
    %93 = arith.subi %91, %c0_i32_58 : i32
    %c0_i32_59 = arith.constant 0 : i32
    %94 = arith.cmpi sge, %93, %c0_i32_59 : i32
    %c8_i32_60 = arith.constant 8 : i32
    %95 = arith.cmpi slt, %93, %c8_i32_60 : i32
    %96 = arith.andi %94, %95 : i1
    %c0_i32_61 = arith.constant 0 : i32
    %c7_i32_62 = arith.constant 7 : i32
    %97 = arith.maxsi %c0_i32_61, %93 : i32
    %98 = arith.minsi %c7_i32_62, %97 : i32
    %c0_63 = arith.constant 0 : index
    %99 = arith.index_cast %98 : i32 to index
    %c0_64 = arith.constant 0 : index
    %c0_65 = arith.constant 0 : index
    %100 = vector.load %arg2[%c0_63, %99, %c0_64, %c0_65] : memref<1x8x16x128xf32, #tpu.memory_space<vmem>>, vector<1x1x8x128xf32>
    %101 = vector.shape_cast %100 : vector<1x1x8x128xf32> to vector<8x128xf32>
    %cst_66 = arith.constant 0.000000e+00 : f32
    %102 = vector.broadcast %cst_66 : f32 to vector<8x128xf32>
    %103 = arith.select %96, %101, %102 : vector<8x128xf32>
    %104 = arith.addf %92, %103 : vector<8x128xf32>
    %c1_i32_67 = arith.constant 1 : i32
    %105 = arith.subi %91, %c1_i32_67 : i32
    %c0_i32_68 = arith.constant 0 : i32
    %106 = arith.cmpi sge, %105, %c0_i32_68 : i32
    %c8_i32_69 = arith.constant 8 : i32
    %107 = arith.cmpi slt, %105, %c8_i32_69 : i32
    %108 = arith.andi %106, %107 : i1
    %c0_i32_70 = arith.constant 0 : i32
    %c7_i32_71 = arith.constant 7 : i32
    %109 = arith.maxsi %c0_i32_70, %105 : i32
    %110 = arith.minsi %c7_i32_71, %109 : i32
    %c0_72 = arith.constant 0 : index
    %111 = arith.index_cast %110 : i32 to index
    %c8_73 = arith.constant 8 : index
    %c0_74 = arith.constant 0 : index
    %112 = vector.load %arg2[%c0_72, %111, %c8_73, %c0_74] : memref<1x8x16x128xf32, #tpu.memory_space<vmem>>, vector<1x1x8x128xf32>
    %113 = vector.shape_cast %112 : vector<1x1x8x128xf32> to vector<8x128xf32>
    %cst_75 = arith.constant 0.000000e+00 : f32
    %114 = vector.broadcast %cst_75 : f32 to vector<8x128xf32>
    %115 = arith.select %108, %113, %114 : vector<8x128xf32>
    %116 = arith.addf %104, %115 : vector<8x128xf32>
    %c7_i32_76 = arith.constant 7 : i32
    %117 = arith.minsi %91, %c7_i32_76 : i32
    %c2_i32_77 = arith.constant 2 : i32
    %118 = arith.subi %91, %c2_i32_77 : i32
    %c1_i32_78 = arith.constant 1 : i32
    %119 = arith.addi %118, %c1_i32_78 : i32
    %c0_i32_79 = arith.constant 0 : i32
    %120 = arith.maxsi %119, %c0_i32_79 : i32
    %121 = arith.subi %117, %120 : i32
    %c1_i32_80 = arith.constant 1 : i32
    %122 = arith.addi %121, %c1_i32_80 : i32
    %c1_i32_81 = arith.constant 1 : i32
    %123 = arith.maxsi %122, %c1_i32_81 : i32
    %124 = arith.sitofp %123 : i32 to f32
    %cst_82 = arith.constant 1.000000e+00 : f32
    %125 = arith.divf %cst_82, %124 : f32
    %126 = vector.broadcast %125 : f32 to vector<8x128xf32>
    %127 = arith.mulf %116, %126 : vector<8x128xf32>
    %c0_83 = arith.constant 0 : index
    %128 = arith.index_cast %89 : i32 to index
    %c0_84 = arith.constant 0 : index
    %129 = vector.load %arg3[%c0_83, %128, %c0_84] : memref<1x64x128xf32, #tpu.memory_space<vmem>>, vector<1x8x128xf32>
    %130 = vector.shape_cast %129 : vector<1x8x128xf32> to vector<8x128xf32>
    %131 = vector.shape_cast %127 : vector<8x128xf32> to vector<1x8x128xf32>
    tpu.vector_store %arg3[%c0_83, %128, %c0_84], %131 {strides = array<i32>} : memref<1x64x128xf32, #tpu.memory_space<vmem>>, vector<1x8x128xf32>,
    %c3_i32 = arith.constant 3 : i32
    %c8_i32_85 = arith.constant 8 : i32
    %132 = arith.muli %c3_i32, %c8_i32_85 : i32
    %133 = tpu.assume_multiple %132, 8 : i32
    %c8_i32_86 = arith.constant 8 : i32
    %134 = arith.muli %arg1, %c8_i32_86 : i32
    %135 = arith.addi %134, %c3_i32 : i32
    %cst_87 = arith.constant 0.000000e+00 : f32
    %136 = vector.broadcast %cst_87 : f32 to vector<8x128xf32>
    %c0_i32_88 = arith.constant 0 : i32
    %137 = arith.subi %135, %c0_i32_88 : i32
    %c0_i32_89 = arith.constant 0 : i32
    %138 = arith.cmpi sge, %137, %c0_i32_89 : i32
    %c8_i32_90 = arith.constant 8 : i32
    %139 = arith.cmpi slt, %137, %c8_i32_90 : i32
    %140 = arith.andi %138, %139 : i1
    %c0_i32_91 = arith.constant 0 : i32
    %c7_i32_92 = arith.constant 7 : i32
    %141 = arith.maxsi %c0_i32_91, %137 : i32
    %142 = arith.minsi %c7_i32_92, %141 : i32
    %c0_93 = arith.constant 0 : index
    %143 = arith.index_cast %142 : i32 to index
    %c0_94 = arith.constant 0 : index
    %c0_95 = arith.constant 0 : index
    %144 = vector.load %arg2[%c0_93, %143, %c0_94, %c0_95] : memref<1x8x16x128xf32, #tpu.memory_space<vmem>>, vector<1x1x8x128xf32>
    %145 = vector.shape_cast %144 : vector<1x1x8x128xf32> to vector<8x128xf32>
    %cst_96 = arith.constant 0.000000e+00 : f32
    %146 = vector.broadcast %cst_96 : f32 to vector<8x128xf32>
    %147 = arith.select %140, %145, %146 : vector<8x128xf32>
    %148 = arith.addf %136, %147 : vector<8x128xf32>
    %c1_i32_97 = arith.constant 1 : i32
    %149 = arith.subi %135, %c1_i32_97 : i32
    %c0_i32_98 = arith.constant 0 : i32
    %150 = arith.cmpi sge, %149, %c0_i32_98 : i32
    %c8_i32_99 = arith.constant 8 : i32
    %151 = arith.cmpi slt, %149, %c8_i32_99 : i32
    %152 = arith.andi %150, %151 : i1
    %c0_i32_100 = arith.constant 0 : i32
    %c7_i32_101 = arith.constant 7 : i32
    %153 = arith.maxsi %c0_i32_100, %149 : i32
    %154 = arith.minsi %c7_i32_101, %153 : i32
    %c0_102 = arith.constant 0 : index
    %155 = arith.index_cast %154 : i32 to index
    %c8_103 = arith.constant 8 : index
    %c0_104 = arith.constant 0 : index
    %156 = vector.load %arg2[%c0_102, %155, %c8_103, %c0_104] : memref<1x8x16x128xf32, #tpu.memory_space<vmem>>, vector<1x1x8x128xf32>
    %157 = vector.shape_cast %156 : vector<1x1x8x128xf32> to vector<8x128xf32>
    %cst_105 = arith.constant 0.000000e+00 : f32
    %158 = vector.broadcast %cst_105 : f32 to vector<8x128xf32>
    %159 = arith.select %152, %157, %158 : vector<8x128xf32>
    %160 = arith.addf %148, %159 : vector<8x128xf32>
    %c7_i32_106 = arith.constant 7 : i32
    %161 = arith.minsi %135, %c7_i32_106 : i32
    %c2_i32_107 = arith.constant 2 : i32
    %162 = arith.subi %135, %c2_i32_107 : i32
    %c1_i32_108 = arith.constant 1 : i32
    %163 = arith.addi %162, %c1_i32_108 : i32
    %c0_i32_109 = arith.constant 0 : i32
    %164 = arith.maxsi %163, %c0_i32_109 : i32
    %165 = arith.subi %161, %164 : i32
    %c1_i32_110 = arith.constant 1 : i32
    %166 = arith.addi %165, %c1_i32_110 : i32
    %c1_i32_111 = arith.constant 1 : i32
    %167 = arith.maxsi %166, %c1_i32_111 : i32
    %168 = arith.sitofp %167 : i32 to f32
    %cst_112 = arith.constant 1.000000e+00 : f32
    %169 = arith.divf %cst_112, %168 : f32
    %170 = vector.broadcast %169 : f32 to vector<8x128xf32>
    %171 = arith.mulf %160, %170 : vector<8x128xf32>
    %c0_113 = arith.constant 0 : index
    %172 = arith.index_cast %133 : i32 to index
    %c0_114 = arith.constant 0 : index
    %173 = vector.load %arg3[%c0_113, %172, %c0_114] : memref<1x64x128xf32, #tpu.memory_space<vmem>>, vector<1x8x128xf32>
    %174 = vector.shape_cast %173 : vector<1x8x128xf32> to vector<8x128xf32>
    %175 = vector.shape_cast %171 : vector<8x128xf32> to vector<1x8x128xf32>
    tpu.vector_store %arg3[%c0_113, %172, %c0_114], %175 {strides = array<i32>} : memref<1x64x128xf32, #tpu.memory_space<vmem>>, vector<1x8x128xf32>,
    %c4_i32 = arith.constant 4 : i32
    %c8_i32_115 = arith.constant 8 : i32
    %176 = arith.muli %c4_i32, %c8_i32_115 : i32
    %177 = tpu.assume_multiple %176, 8 : i32
    %c8_i32_116 = arith.constant 8 : i32
    %178 = arith.muli %arg1, %c8_i32_116 : i32
    %179 = arith.addi %178, %c4_i32 : i32
    %cst_117 = arith.constant 0.000000e+00 : f32
    %180 = vector.broadcast %cst_117 : f32 to vector<8x128xf32>
    %c0_i32_118 = arith.constant 0 : i32
    %181 = arith.subi %179, %c0_i32_118 : i32
    %c0_i32_119 = arith.constant 0 : i32
    %182 = arith.cmpi sge, %181, %c0_i32_119 : i32
    %c8_i32_120 = arith.constant 8 : i32
    %183 = arith.cmpi slt, %181, %c8_i32_120 : i32
    %184 = arith.andi %182, %183 : i1
    %c0_i32_121 = arith.constant 0 : i32
    %c7_i32_122 = arith.constant 7 : i32
    %185 = arith.maxsi %c0_i32_121, %181 : i32
    %186 = arith.minsi %c7_i32_122, %185 : i32
    %c0_123 = arith.constant 0 : index
    %187 = arith.index_cast %186 : i32 to index
    %c0_124 = arith.constant 0 : index
    %c0_125 = arith.constant 0 : index
    %188 = vector.load %arg2[%c0_123, %187, %c0_124, %c0_125] : memref<1x8x16x128xf32, #tpu.memory_space<vmem>>, vector<1x1x8x128xf32>
    %189 = vector.shape_cast %188 : vector<1x1x8x128xf32> to vector<8x128xf32>
    %cst_126 = arith.constant 0.000000e+00 : f32
    %190 = vector.broadcast %cst_126 : f32 to vector<8x128xf32>
    %191 = arith.select %184, %189, %190 : vector<8x128xf32>
    %192 = arith.addf %180, %191 : vector<8x128xf32>
    %c1_i32_127 = arith.constant 1 : i32
    %193 = arith.subi %179, %c1_i32_127 : i32
    %c0_i32_128 = arith.constant 0 : i32
    %194 = arith.cmpi sge, %193, %c0_i32_128 : i32
    %c8_i32_129 = arith.constant 8 : i32
    %195 = arith.cmpi slt, %193, %c8_i32_129 : i32
    %196 = arith.andi %194, %195 : i1
    %c0_i32_130 = arith.constant 0 : i32
    %c7_i32_131 = arith.constant 7 : i32
    %197 = arith.maxsi %c0_i32_130, %193 : i32
    %198 = arith.minsi %c7_i32_131, %197 : i32
    %c0_132 = arith.constant 0 : index
    %199 = arith.index_cast %198 : i32 to index
    %c8_133 = arith.constant 8 : index
    %c0_134 = arith.constant 0 : index
    %200 = vector.load %arg2[%c0_132, %199, %c8_133, %c0_134] : memref<1x8x16x128xf32, #tpu.memory_space<vmem>>, vector<1x1x8x128xf32>
    %201 = vector.shape_cast %200 : vector<1x1x8x128xf32> to vector<8x128xf32>
    %cst_135 = arith.constant 0.000000e+00 : f32
    %202 = vector.broadcast %cst_135 : f32 to vector<8x128xf32>
    %203 = arith.select %196, %201, %202 : vector<8x128xf32>
    %204 = arith.addf %192, %203 : vector<8x128xf32>
    %c7_i32_136 = arith.constant 7 : i32
    %205 = arith.minsi %179, %c7_i32_136 : i32
    %c2_i32_137 = arith.constant 2 : i32
    %206 = arith.subi %179, %c2_i32_137 : i32
    %c1_i32_138 = arith.constant 1 : i32
    %207 = arith.addi %206, %c1_i32_138 : i32
    %c0_i32_139 = arith.constant 0 : i32
    %208 = arith.maxsi %207, %c0_i32_139 : i32
    %209 = arith.subi %205, %208 : i32
    %c1_i32_140 = arith.constant 1 : i32
    %210 = arith.addi %209, %c1_i32_140 : i32
    %c1_i32_141 = arith.constant 1 : i32
    %211 = arith.maxsi %210, %c1_i32_141 : i32
    %212 = arith.sitofp %211 : i32 to f32
    %cst_142 = arith.constant 1.000000e+00 : f32
    %213 = arith.divf %cst_142, %212 : f32
    %214 = vector.broadcast %213 : f32 to vector<8x128xf32>
    %215 = arith.mulf %204, %214 : vector<8x128xf32>
    %c0_143 = arith.constant 0 : index
    %216 = arith.index_cast %177 : i32 to index
    %c0_144 = arith.constant 0 : index
    %217 = vector.load %arg3[%c0_143, %216, %c0_144] : memref<1x64x128xf32, #tpu.memory_space<vmem>>, vector<1x8x128xf32>
    %218 = vector.shape_cast %217 : vector<1x8x128xf32> to vector<8x128xf32>
    %219 = vector.shape_cast %215 : vector<8x128xf32> to vector<1x8x128xf32>
    tpu.vector_store %arg3[%c0_143, %216, %c0_144], %219 {strides = array<i32>} : memref<1x64x128xf32, #tpu.memory_space<vmem>>, vector<1x8x128xf32>,
    %c5_i32 = arith.constant 5 : i32
    %c8_i32_145 = arith.constant 8 : i32
    %220 = arith.muli %c5_i32, %c8_i32_145 : i32
    %221 = tpu.assume_multiple %220, 8 : i32
    %c8_i32_146 = arith.constant 8 : i32
    %222 = arith.muli %arg1, %c8_i32_146 : i32
    %223 = arith.addi %222, %c5_i32 : i32
    %cst_147 = arith.constant 0.000000e+00 : f32
    %224 = vector.broadcast %cst_147 : f32 to vector<8x128xf32>
    %c0_i32_148 = arith.constant 0 : i32
    %225 = arith.subi %223, %c0_i32_148 : i32
    %c0_i32_149 = arith.constant 0 : i32
    %226 = arith.cmpi sge, %225, %c0_i32_149 : i32
    %c8_i32_150 = arith.constant 8 : i32
    %227 = arith.cmpi slt, %225, %c8_i32_150 : i32
    %228 = arith.andi %226, %227 : i1
    %c0_i32_151 = arith.constant 0 : i32
    %c7_i32_152 = arith.constant 7 : i32
    %229 = arith.maxsi %c0_i32_151, %225 : i32
    %230 = arith.minsi %c7_i32_152, %229 : i32
    %c0_153 = arith.constant 0 : index
    %231 = arith.index_cast %230 : i32 to index
    %c0_154 = arith.constant 0 : index
    %c0_155 = arith.constant 0 : index
    %232 = vector.load %arg2[%c0_153, %231, %c0_154, %c0_155] : memref<1x8x16x128xf32, #tpu.memory_space<vmem>>, vector<1x1x8x128xf32>
    %233 = vector.shape_cast %232 : vector<1x1x8x128xf32> to vector<8x128xf32>
    %cst_156 = arith.constant 0.000000e+00 : f32
    %234 = vector.broadcast %cst_156 : f32 to vector<8x128xf32>
    %235 = arith.select %228, %233, %234 : vector<8x128xf32>
    %236 = arith.addf %224, %235 : vector<8x128xf32>
    %c1_i32_157 = arith.constant 1 : i32
    %237 = arith.subi %223, %c1_i32_157 : i32
    %c0_i32_158 = arith.constant 0 : i32
    %238 = arith.cmpi sge, %237, %c0_i32_158 : i32
    %c8_i32_159 = arith.constant 8 : i32
    %239 = arith.cmpi slt, %237, %c8_i32_159 : i32
    %240 = arith.andi %238, %239 : i1
    %c0_i32_160 = arith.constant 0 : i32
    %c7_i32_161 = arith.constant 7 : i32
    %241 = arith.maxsi %c0_i32_160, %237 : i32
    %242 = arith.minsi %c7_i32_161, %241 : i32
    %c0_162 = arith.constant 0 : index
    %243 = arith.index_cast %242 : i32 to index
    %c8_163 = arith.constant 8 : index
    %c0_164 = arith.constant 0 : index
    %244 = vector.load %arg2[%c0_162, %243, %c8_163, %c0_164] : memref<1x8x16x128xf32, #tpu.memory_space<vmem>>, vector<1x1x8x128xf32>
    %245 = vector.shape_cast %244 : vector<1x1x8x128xf32> to vector<8x128xf32>
    %cst_165 = arith.constant 0.000000e+00 : f32
    %246 = vector.broadcast %cst_165 : f32 to vector<8x128xf32>
    %247 = arith.select %240, %245, %246 : vector<8x128xf32>
    %248 = arith.addf %236, %247 : vector<8x128xf32>
    %c7_i32_166 = arith.constant 7 : i32
    %249 = arith.minsi %223, %c7_i32_166 : i32
    %c2_i32_167 = arith.constant 2 : i32
    %250 = arith.subi %223, %c2_i32_167 : i32
    %c1_i32_168 = arith.constant 1 : i32
    %251 = arith.addi %250, %c1_i32_168 : i32
    %c0_i32_169 = arith.constant 0 : i32
    %252 = arith.maxsi %251, %c0_i32_169 : i32
    %253 = arith.subi %249, %252 : i32
    %c1_i32_170 = arith.constant 1 : i32
    %254 = arith.addi %253, %c1_i32_170 : i32
    %c1_i32_171 = arith.constant 1 : i32
    %255 = arith.maxsi %254, %c1_i32_171 : i32
    %256 = arith.sitofp %255 : i32 to f32
    %cst_172 = arith.constant 1.000000e+00 : f32
    %257 = arith.divf %cst_172, %256 : f32
    %258 = vector.broadcast %257 : f32 to vector<8x128xf32>
    %259 = arith.mulf %248, %258 : vector<8x128xf32>
    %c0_173 = arith.constant 0 : index
    %260 = arith.index_cast %221 : i32 to index
    %c0_174 = arith.constant 0 : index
    %261 = vector.load %arg3[%c0_173, %260, %c0_174] : memref<1x64x128xf32, #tpu.memory_space<vmem>>, vector<1x8x128xf32>
    %262 = vector.shape_cast %261 : vector<1x8x128xf32> to vector<8x128xf32>
    %263 = vector.shape_cast %259 : vector<8x128xf32> to vector<1x8x128xf32>
    tpu.vector_store %arg3[%c0_173, %260, %c0_174], %263 {strides = array<i32>} : memref<1x64x128xf32, #tpu.memory_space<vmem>>, vector<1x8x128xf32>,
    %c6_i32 = arith.constant 6 : i32
    %c8_i32_175 = arith.constant 8 : i32
    %264 = arith.muli %c6_i32, %c8_i32_175 : i32
    %265 = tpu.assume_multiple %264, 8 : i32
    %c8_i32_176 = arith.constant 8 : i32
    %266 = arith.muli %arg1, %c8_i32_176 : i32
    %267 = arith.addi %266, %c6_i32 : i32
    %cst_177 = arith.constant 0.000000e+00 : f32
    %268 = vector.broadcast %cst_177 : f32 to vector<8x128xf32>
    %c0_i32_178 = arith.constant 0 : i32
    %269 = arith.subi %267, %c0_i32_178 : i32
    %c0_i32_179 = arith.constant 0 : i32
    %270 = arith.cmpi sge, %269, %c0_i32_179 : i32
    %c8_i32_180 = arith.constant 8 : i32
    %271 = arith.cmpi slt, %269, %c8_i32_180 : i32
    %272 = arith.andi %270, %271 : i1
    %c0_i32_181 = arith.constant 0 : i32
    %c7_i32_182 = arith.constant 7 : i32
    %273 = arith.maxsi %c0_i32_181, %269 : i32
    %274 = arith.minsi %c7_i32_182, %273 : i32
    %c0_183 = arith.constant 0 : index
    %275 = arith.index_cast %274 : i32 to index
    %c0_184 = arith.constant 0 : index
    %c0_185 = arith.constant 0 : index
    %276 = vector.load %arg2[%c0_183, %275, %c0_184, %c0_185] : memref<1x8x16x128xf32, #tpu.memory_space<vmem>>, vector<1x1x8x128xf32>
    %277 = vector.shape_cast %276 : vector<1x1x8x128xf32> to vector<8x128xf32>
    %cst_186 = arith.constant 0.000000e+00 : f32
    %278 = vector.broadcast %cst_186 : f32 to vector<8x128xf32>
    %279 = arith.select %272, %277, %278 : vector<8x128xf32>
    %280 = arith.addf %268, %279 : vector<8x128xf32>
    %c1_i32_187 = arith.constant 1 : i32
    %281 = arith.subi %267, %c1_i32_187 : i32
    %c0_i32_188 = arith.constant 0 : i32
    %282 = arith.cmpi sge, %281, %c0_i32_188 : i32
    %c8_i32_189 = arith.constant 8 : i32
    %283 = arith.cmpi slt, %281, %c8_i32_189 : i32
    %284 = arith.andi %282, %283 : i1
    %c0_i32_190 = arith.constant 0 : i32
    %c7_i32_191 = arith.constant 7 : i32
    %285 = arith.maxsi %c0_i32_190, %281 : i32
    %286 = arith.minsi %c7_i32_191, %285 : i32
    %c0_192 = arith.constant 0 : index
    %287 = arith.index_cast %286 : i32 to index
    %c8_193 = arith.constant 8 : index
    %c0_194 = arith.constant 0 : index
    %288 = vector.load %arg2[%c0_192, %287, %c8_193, %c0_194] : memref<1x8x16x128xf32, #tpu.memory_space<vmem>>, vector<1x1x8x128xf32>
    %289 = vector.shape_cast %288 : vector<1x1x8x128xf32> to vector<8x128xf32>
    %cst_195 = arith.constant 0.000000e+00 : f32
    %290 = vector.broadcast %cst_195 : f32 to vector<8x128xf32>
    %291 = arith.select %284, %289, %290 : vector<8x128xf32>
    %292 = arith.addf %280, %291 : vector<8x128xf32>
    %c7_i32_196 = arith.constant 7 : i32
    %293 = arith.minsi %267, %c7_i32_196 : i32
    %c2_i32_197 = arith.constant 2 : i32
    %294 = arith.subi %267, %c2_i32_197 : i32
    %c1_i32_198 = arith.constant 1 : i32
    %295 = arith.addi %294, %c1_i32_198 : i32
    %c0_i32_199 = arith.constant 0 : i32
    %296 = arith.maxsi %295, %c0_i32_199 : i32
    %297 = arith.subi %293, %296 : i32
    %c1_i32_200 = arith.constant 1 : i32
    %298 = arith.addi %297, %c1_i32_200 : i32
    %c1_i32_201 = arith.constant 1 : i32
    %299 = arith.maxsi %298, %c1_i32_201 : i32
    %300 = arith.sitofp %299 : i32 to f32
    %cst_202 = arith.constant 1.000000e+00 : f32
    %301 = arith.divf %cst_202, %300 : f32
    %302 = vector.broadcast %301 : f32 to vector<8x128xf32>
    %303 = arith.mulf %292, %302 : vector<8x128xf32>
    %c0_203 = arith.constant 0 : index
    %304 = arith.index_cast %265 : i32 to index
    %c0_204 = arith.constant 0 : index
    %305 = vector.load %arg3[%c0_203, %304, %c0_204] : memref<1x64x128xf32, #tpu.memory_space<vmem>>, vector<1x8x128xf32>
    %306 = vector.shape_cast %305 : vector<1x8x128xf32> to vector<8x128xf32>
    %307 = vector.shape_cast %303 : vector<8x128xf32> to vector<1x8x128xf32>
    tpu.vector_store %arg3[%c0_203, %304, %c0_204], %307 {strides = array<i32>} : memref<1x64x128xf32, #tpu.memory_space<vmem>>, vector<1x8x128xf32>,
    %c7_i32_205 = arith.constant 7 : i32
    %c8_i32_206 = arith.constant 8 : i32
    %308 = arith.muli %c7_i32_205, %c8_i32_206 : i32
    %309 = tpu.assume_multiple %308, 8 : i32
    %c8_i32_207 = arith.constant 8 : i32
    %310 = arith.muli %arg1, %c8_i32_207 : i32
    %311 = arith.addi %310, %c7_i32_205 : i32
    %cst_208 = arith.constant 0.000000e+00 : f32
    %312 = vector.broadcast %cst_208 : f32 to vector<8x128xf32>
    %c0_i32_209 = arith.constant 0 : i32
    %313 = arith.subi %311, %c0_i32_209 : i32
    %c0_i32_210 = arith.constant 0 : i32
    %314 = arith.cmpi sge, %313, %c0_i32_210 : i32
    %c8_i32_211 = arith.constant 8 : i32
    %315 = arith.cmpi slt, %313, %c8_i32_211 : i32
    %316 = arith.andi %314, %315 : i1
    %c0_i32_212 = arith.constant 0 : i32
    %c7_i32_213 = arith.constant 7 : i32
    %317 = arith.maxsi %c0_i32_212, %313 : i32
    %318 = arith.minsi %c7_i32_213, %317 : i32
    %c0_214 = arith.constant 0 : index
    %319 = arith.index_cast %318 : i32 to index
    %c0_215 = arith.constant 0 : index
    %c0_216 = arith.constant 0 : index
    %320 = vector.load %arg2[%c0_214, %319, %c0_215, %c0_216] : memref<1x8x16x128xf32, #tpu.memory_space<vmem>>, vector<1x1x8x128xf32>
    %321 = vector.shape_cast %320 : vector<1x1x8x128xf32> to vector<8x128xf32>
    %cst_217 = arith.constant 0.000000e+00 : f32
    %322 = vector.broadcast %cst_217 : f32 to vector<8x128xf32>
    %323 = arith.select %316, %321, %322 : vector<8x128xf32>
    %324 = arith.addf %312, %323 : vector<8x128xf32>
    %c1_i32_218 = arith.constant 1 : i32
    %325 = arith.subi %311, %c1_i32_218 : i32
    %c0_i32_219 = arith.constant 0 : i32
    %326 = arith.cmpi sge, %325, %c0_i32_219 : i32
    %c8_i32_220 = arith.constant 8 : i32
    %327 = arith.cmpi slt, %325, %c8_i32_220 : i32
    %328 = arith.andi %326, %327 : i1
    %c0_i32_221 = arith.constant 0 : i32
    %c7_i32_222 = arith.constant 7 : i32
    %329 = arith.maxsi %c0_i32_221, %325 : i32
    %330 = arith.minsi %c7_i32_222, %329 : i32
    %c0_223 = arith.constant 0 : index
    %331 = arith.index_cast %330 : i32 to index
    %c8_224 = arith.constant 8 : index
    %c0_225 = arith.constant 0 : index
    %332 = vector.load %arg2[%c0_223, %331, %c8_224, %c0_225] : memref<1x8x16x128xf32, #tpu.memory_space<vmem>>, vector<1x1x8x128xf32>
    %333 = vector.shape_cast %332 : vector<1x1x8x128xf32> to vector<8x128xf32>
    %cst_226 = arith.constant 0.000000e+00 : f32
    %334 = vector.broadcast %cst_226 : f32 to vector<8x128xf32>
    %335 = arith.select %328, %333, %334 : vector<8x128xf32>
    %336 = arith.addf %324, %335 : vector<8x128xf32>
    %c7_i32_227 = arith.constant 7 : i32
    %337 = arith.minsi %311, %c7_i32_227 : i32
    %c2_i32_228 = arith.constant 2 : i32
    %338 = arith.subi %311, %c2_i32_228 : i32
    %c1_i32_229 = arith.constant 1 : i32
    %339 = arith.addi %338, %c1_i32_229 : i32
    %c0_i32_230 = arith.constant 0 : i32
    %340 = arith.maxsi %339, %c0_i32_230 : i32
    %341 = arith.subi %337, %340 : i32
    %c1_i32_231 = arith.constant 1 : i32
    %342 = arith.addi %341, %c1_i32_231 : i32
    %c1_i32_232 = arith.constant 1 : i32
    %343 = arith.maxsi %342, %c1_i32_232 : i32
    %344 = arith.sitofp %343 : i32 to f32
    %cst_233 = arith.constant 1.000000e+00 : f32
    %345 = arith.divf %cst_233, %344 : f32
    %346 = vector.broadcast %345 : f32 to vector<8x128xf32>
    %347 = arith.mulf %336, %346 : vector<8x128xf32>
    %c0_234 = arith.constant 0 : index
    %348 = arith.index_cast %309 : i32 to index
    %c0_235 = arith.constant 0 : index
    %349 = vector.load %arg3[%c0_234, %348, %c0_235] : memref<1x64x128xf32, #tpu.memory_space<vmem>>, vector<1x8x128xf32>
    %350 = vector.shape_cast %349 : vector<1x8x128xf32> to vector<8x128xf32>
    %351 = vector.shape_cast %347 : vector<8x128xf32> to vector<1x8x128xf32>
    tpu.vector_store %arg3[%c0_234, %348, %c0_235], %351 {strides = array<i32>} : memref<1x64x128xf32, #tpu.memory_space<vmem>>, vector<1x8x128xf32>,
    %c8_i32_236 = arith.constant 8 : i32
    return
  }
  func.func @transform_0(%arg0: i32, %arg1: i32) -> (i32, i32, i32, i32) {
    %c0_i32 = arith.constant 0 : i32
    %c0_i32_0 = arith.constant 0 : i32
    %c0_i32_1 = arith.constant 0 : i32
    %c0_i32_2 = arith.constant 0 : i32
    return %arg0, %c0_i32, %c0_i32_0, %c0_i32_1 : i32, i32, i32, i32
  }
  func.func @transform_1(%arg0: i32, %arg1: i32) -> (i32, i32, i32) {
    %c0_i32 = arith.constant 0 : i32
    %c0_i32_0 = arith.constant 0 : i32
    return %arg0, %arg1, %c0_i32 : i32, i32, i32
  }
}

</mosaic_0001>

<llo_original>
// kernel: tpu_custom_call.1
$region0: #{tpu_custom_call.1}
  #allocation0 [shape = 'u32[]', space=smem, size = 0x4, offset = 0x4, fixed_abs, tag = 'smem constant byte address 0x4 - core index']
  #allocation1 [shape = 'u32[144,128]{1,0:T(1,128)}', space=vmem, size = 0x12000, scoped, tag = 'internal scratch']
  %s0 = inlined_call_operand.hbm [shape: f32[2,8,16,128], index: 0, kind: input, shape index: {}]
  %s1 = inlined_call_operand.vmem [shape: f32[2,70,128], index: 1, kind: output, shape index: {}]
  %s2 = sld [smem:[#allocation0]]
  $region89: #{tpu_custom_call.1} parent=0
    _
  %s4 = ssub.s32 1, %s2
  %s5 = scalar_select 0, %s4, %s2
  $region1: #{tpu_custom_call.1} parent=0
    #allocation2 [shape = 'u8[131072]{0}', space=vmem, size = 0x20000, scoped, tag = 'input window, operand 0']
    #allocation3 [shape = 's32[2]{0}', space=sflag, size = 0x8, scoped, tag = 'scoped memory for tpu_custom_call.1']
    #allocation4 [shape = 'u8[65536]{0}', space=vmem, size = 0x10000, scoped, tag = 'output window, operand 0']
    %6 = vsyncpa [#allocation3], 0
    %s7 = scalar_lea.sflag [#allocation3], 1
    %8 = vsyncpa %s7, 0
    loop: start=0, step=1, limit=6
    $region2: #{tpu_custom_call.1} parent=1 // loop_pre_header
      _
    $region3: #{tpu_custom_call.1} parent=1 // loop_header
      %s10 = sphi 0, %s14
      %p11 = scmp.ge.s32.totalorder %s10, 6
      %s17 = sphi 0, %s29
      %s18 = sphi 0, %s25
      %s19 = sphi 0, %s17
      %s20 = sphi 0, %s18
      %s21 = sphi 0, %s19
      %s22 = sphi 0, %s20
      %s32 = sphi 0, %s34
      %s35 = sphi 0, %s32
      %s36 = sphi 0, %s35
      %s52 = sphi 0, %s36
      %s60 = sphi 0, %s62
      %s63 = sphi 0, %s60
      %s64 = sphi 0, %s63
      %s80 = sphi 0, %s64
    $region4: #{tpu_custom_call.1} parent=1 // loop_header_branch
      %13 = sbr.rel (%p11) target = $region8
    $region5: #{tpu_custom_call.1} parent=1 // loop_body
      %s15 = ssub.s32 %s10, 1
      %s16 = ssub.s32 %s10, 2
      %s23 = sadd.s32 1, %s18
      %p24 = scmp.ge.s32.totalorder %s23, 2
      %s25 = scalar_select %p24, 0, %s23
      %s26 = sadd.s32 1, %s17
      %s27 = scalar_select %p24, %s26, %s17
      %p28 = scmp.ge.s32.totalorder %s27, 2
      %s29 = scalar_select %p28, 0, %s27
      %s30 = ssub.s32 %s17, %s29
      %p31 = scmp.eq.s32.totalorder %s30, 0
      %s33 = sadd.s32 %s32, 1
      %s34 = scalar_select %p31, %s32, %s33
      %p37 = pneg %p31
      %p38 = scmp.eq.s32.totalorder %s10, 3
      %p39 = por %p37, %p38
      %p40 = scmp.ne.s32.totalorder %s32, %s35
      %p41 = scmp.eq.s32.totalorder %s10, 0
      %p42 = por %p40, %p41
      %p43 = scmp.ne.s32.totalorder %s32, %s35
      %p44 = scmp.eq.s32.totalorder %s15, 3
      %p45 = por %p43, %p44
      %p46 = scmp.ne.s32.totalorder %s35, %s36
      %p47 = scmp.eq.s32.totalorder %s15, 0
      %p48 = por %p46, %p47
      %p49 = scmp.ne.s32.totalorder %s35, %s36
      %p50 = scmp.eq.s32.totalorder %s16, 3
      %p51 = por %p49, %p50
      %p53 = scmp.ne.s32.totalorder %s36, %s52
      %p54 = scmp.eq.s32.totalorder %s16, 0
      %p55 = por %p53, %p54
      %s56 = ssub.s32 %s17, %s29
      %s57 = ssub.s32 %s18, %s25
      %s58 = sor.u32 %s56, %s57
      %p59 = scmp.eq.s32.totalorder %s58, 0
      %s61 = sadd.s32 %s60, 1
      %s62 = scalar_select %p59, %s60, %s61
      %p65 = pneg %p59
      %p66 = scmp.eq.s32.totalorder %s10, 3
      %p67 = por %p65, %p66
      %p68 = scmp.ne.s32.totalorder %s60, %s63
      %p69 = scmp.eq.s32.totalorder %s10, 0
      %p70 = por %p68, %p69
      %p71 = scmp.ne.s32.totalorder %s60, %s63
      %p72 = scmp.eq.s32.totalorder %s15, 3
      %p73 = por %p71, %p72
      %p74 = scmp.ne.s32.totalorder %s63, %s64
      %p75 = scmp.eq.s32.totalorder %s15, 0
      %p76 = por %p74, %p75
      %p77 = scmp.ne.s32.totalorder %s63, %s64
      %p78 = scmp.eq.s32.totalorder %s16, 3
      %p79 = por %p77, %p78
      %p81 = scmp.ne.s32.totalorder %s64, %s80
      %p82 = scmp.eq.s32.totalorder %s16, 0
      %p83 = por %p81, %p82
      %p84 = scmp.le.s32.totalorder 1, %s10
      %p85 = scmp.lt.s32.totalorder %s10, 5
      %p86 = pnand %p84, %p85
      %p87 = pneg %p86
      // Predicated region
      $region9: #{tpu_custom_call.1} parent=5 // pred_check
        _
      $region10: #{tpu_custom_call.1} parent=5 // pred_check_branch
        %89 = sbr.rel (%p86) target = $region12
      $region11: #{tpu_custom_call.1} parent=5 // pred_region
        %s90 = ssub.s32 %s10, 1
      $region12: #{tpu_custom_call.1} parent=5 // pred_fallthru
        _
      %p91 = scmp.lt.s32.totalorder %s10, 4
      // Predicated region
      $region13: #{tpu_custom_call.1} parent=5 // pred_check
        %p92 = pneg %p91
      $region14: #{tpu_custom_call.1} parent=5 // pred_check_branch
        %94 = sbr.rel (%p92) target = $region16
      $region15: #{tpu_custom_call.1} parent=5 // pred_region
        // Predicated region
        $region17: #{tpu_custom_call.1} parent=15 // pred_check
          %p95 = pneg %p42
        $region18: #{tpu_custom_call.1} parent=15 // pred_check_branch
          %97 = sbr.rel (%p95) target = $region20
        $region19: #{tpu_custom_call.1} parent=15 // pred_region
          %s98 = sand.u32 %s32, 1
          %s99 = scalar_lea.sflag [#allocation3], %s98
          %s100 = sand.u32 %s32, 1
          %s101 = smul.addr %s100, 128
          %s102 = scalar_lea.vmem [#allocation2], %s101
          %s104 = ssub.s32 2048, 2048
          %105 = vsyncadd %s99, %s104
          %s106 = smul.addr %s17, 16
          %s107 = smul.addr %s106, 128
          %s108 = scalar_lea.hbm %s0, %s107
          %s109 = sshll.u32 %s102, 4
          %s110 = int_to_ptr.vmem [resolvable:$true] %s109
          %115 = dma.hbm_to_vmem [thread:$0]  %s108, 2048, %s110, %s99, 128, 128, 8
        $region20: #{tpu_custom_call.1} parent=15 // pred_fallthru
          _
      $region16: #{tpu_custom_call.1} parent=5 // pred_fallthru
        _
      %p116 = scmp.le.s32.totalorder 1, %s10
      %p117 = scmp.lt.s32.totalorder %s10, 5
      %p118 = pnand %p116, %p117
      %p119 = pneg %p118
      // Predicated region
      $region21: #{tpu_custom_call.1} parent=5 // pred_check
        _
      $region22: #{tpu_custom_call.1} parent=5 // pred_check_branch
        %121 = sbr.rel (%p118) target = $region24
      $region23: #{tpu_custom_call.1} parent=5 // pred_region
        %s122 = ssub.s32 %s10, 1
        %s123 = sand.u32 %s35, 1
        %s124 = scalar_lea.sflag [#allocation3], %s123
        %s125 = sand.u32 %s35, 1
        %s126 = smul.addr %s125, 128
        %s127 = scalar_lea.vmem [#allocation2], %s126
        // Predicated region
        $region25: #{tpu_custom_call.1} parent=23 // pred_check
          %p128 = pneg %p48
        $region26: #{tpu_custom_call.1} parent=23 // pred_check_branch
          %130 = sbr.rel (%p128) target = $region28
        $region27: #{tpu_custom_call.1} parent=23 // pred_region
          %131 = dma.done %s124, 2048
        $region28: #{tpu_custom_call.1} parent=23 // pred_fallthru
          _
        %s132 = sand.u32 %s35, 1
        %s133 = scalar_lea.sflag [#allocation3], %s132
        %s134 = sand.u32 %s35, 1
        %s135 = smul.addr %s134, 128
        %s136 = scalar_lea.vmem [#allocation2], %s135
        %p137 = pneg %p48
        %p138 = pneg %p45
        %p139 = pneg %p76
        %p140 = pneg %p73
        %s141 = sand.u32 %s63, 1
        %s142 = sand.u32 %s63, 1
        %s143 = smul.addr %s142, 64
        %s144 = scalar_lea.vmem [#allocation4], %s143
        %s145 = smul.u32 8, %s20
        %s146 = ssub.s32 9, %s145
        %p147 = scmp.lt.s32.totalorder %s146, 8
        %s148 = scalar_select %p147, %s146, 8
        %s149 = smul.u32 128, %s148
        %s150 = smul.u32 %s20, 8
        %p151 = scmp.ge.s32.totalorder %s150, 0
        %p152 = scmp.lt.s32.totalorder %s150, 8
        %p153 = pnand %p151, %p152
        %p154 = pneg %p153
        %p155 = scmp.gt.s32.totalorder %s150, 0
        %s156 = scalar_select %p155, %s150, 0
        %p157 = scmp.lt.s32.totalorder %s156, 7
        %s158 = scalar_select %p157, %s156, 7
        %s159 = smul.u32 %s158, 16
        %s160 = scalar_lea.vmem %s127, %s159 [#allocation2]
        %v161 = vld [vmem:[%s160] sm:$0xff]
        %s162 = scalar_select %p154, 1, 0
        %v163 = vstv %s162
        %vm164 = vcmp.eq.s32.totalorder %v163, 1
        %v165 = vsel %vm164, %v161, 0.0
        %v166 = vadd.f32 %v165, 0.0
        %s167 = sadd.s32 %s150, 4294967295
        %p168 = scmp.ge.s32.totalorder %s167, 0
        %p169 = scmp.lt.s32.totalorder %s167, 8
        %p170 = pnand %p168, %p169
        %p171 = pneg %p170
        %p172 = scmp.gt.s32.totalorder %s167, 0
        %s173 = scalar_select %p172, %s167, 0
        %p174 = scmp.lt.s32.totalorder %s173, 7
        %s175 = scalar_select %p174, %s173, 7
        %s176 = smul.u32 %s175, 16
        %s177 = scalar_lea.vmem %s127, %s176 [#allocation2]
        %v178 = vld [vmem:[%s177 + $0x8] sm:$0xff]
        %s179 = scalar_select %p171, 1, 0
        %v180 = vstv %s179
        %vm181 = vcmp.eq.s32.totalorder %v180, 1
        %v182 = vsel %vm181, %v178, 0.0
        %v183 = vadd.f32 %v166, %v182
        %p184 = scmp.lt.s32.totalorder %s150, 7
        %s185 = scalar_select %p184, %s150, 7
        %s186 = ssub.s32 %s185, %s173
        %s187 = sadd.s32 %s186, 1
        %p188 = scmp.gt.s32.totalorder %s187, 1
        %s189 = scalar_select %p188, %s187, 1
        %s190 = scvt.s32.f32 %s189
        %v191 = vstv %s190
        %v192 = vrcp.pop %v191
        %s193 = vtos %v192
        %v194 = vstv %s193
        %v195 = vmul.f32 %v183, %v194
        %196 = vst [vmem:[%s144] sm:$0xff] %v195
        %s197 = sadd.s32 %s150, 1
        %p198 = scmp.ge.s32.totalorder %s197, 0
        %p199 = scmp.lt.s32.totalorder %s197, 8
        %p200 = pnand %p198, %p199
        %p201 = pneg %p200
        %p202 = scmp.gt.s32.totalorder %s197, 0
        %s203 = scalar_select %p202, %s197, 0
        %p204 = scmp.lt.s32.totalorder %s203, 7
        %s205 = scalar_select %p204, %s203, 7
        %s206 = smul.u32 %s205, 16
        %s207 = scalar_lea.vmem %s127, %s206 [#allocation2]
        %v208 = vld [vmem:[%s207] sm:$0xff]
        %s209 = scalar_select %p201, 1, 0
        %v210 = vstv %s209
        %vm211 = vcmp.eq.s32.totalorder %v210, 1
        %v212 = vsel %vm211, %v208, 0.0
        %v213 = vadd.f32 %v212, 0.0
        %v214 = vld [vmem:[%s160 + $0x8] sm:$0xff]
        %v215 = vsel %vm164, %v214, 0.0
        %v216 = vadd.f32 %v213, %v215
        %p217 = scmp.lt.s32.totalorder %s197, 7
        %s218 = scalar_select %p217, %s197, 7
        %s219 = ssub.s32 %s218, %s156
        %s220 = sadd.s32 %s219, 1
        %p221 = scmp.gt.s32.totalorder %s220, 1
        %s222 = scalar_select %p221, %s220, 1
        %s223 = scvt.s32.f32 %s222
        %v224 = vstv %s223
        %v225 = vrcp.pop %v224
        %s226 = vtos %v225
        %v227 = vstv %s226
        %v228 = vmul.f32 %v216, %v227
        %s229 = scalar_lea.vmem %s144, 8 [#allocation4]
        %230 = vst [vmem:[%s229] sm:$0xff] %v228
        %s231 = sadd.s32 %s150, 2
        %p232 = scmp.ge.s32.totalorder %s231, 0
        %p233 = scmp.lt.s32.totalorder %s231, 8
        %p234 = pnand %p232, %p233
        %p235 = pneg %p234
        %p236 = scmp.gt.s32.totalorder %s231, 0
        %s237 = scalar_select %p236, %s231, 0
        %p238 = scmp.lt.s32.totalorder %s237, 7
        %s239 = scalar_select %p238, %s237, 7
        %s240 = smul.u32 %s239, 16
        %s241 = scalar_lea.vmem %s127, %s240 [#allocation2]
        %v242 = vld [vmem:[%s241] sm:$0xff]
        %s243 = scalar_select %p235, 1, 0
        %v244 = vstv %s243
        %vm245 = vcmp.eq.s32.totalorder %v244, 1
        %v246 = vsel %vm245, %v242, 0.0
        %v247 = vadd.f32 %v246, 0.0
        %v248 = vld [vmem:[%s207 + $0x8] sm:$0xff]
        %v249 = vsel %vm211, %v248, 0.0
        %v250 = vadd.f32 %v247, %v249
        %p251 = scmp.lt.s32.totalorder %s231, 7
        %s252 = scalar_select %p251, %s231, 7
        %s253 = ssub.s32 %s252, %s203
        %s254 = sadd.s32 %s253, 1
        %p255 = scmp.gt.s32.totalorder %s254, 1
        %s256 = scalar_select %p255, %s254, 1
        %s257 = scvt.s32.f32 %s256
        %v258 = vstv %s257
        %v259 = vrcp.pop %v258
        %s260 = vtos %v259
        %v261 = vstv %s260
        %v262 = vmul.f32 %v250, %v261
        %s263 = scalar_lea.vmem %s144, 16 [#allocation4]
        %264 = vst [vmem:[%s263] sm:$0xff] %v262
        %s265 = sadd.s32 %s150, 3
        %p266 = scmp.ge.s32.totalorder %s265, 0
        %p267 = scmp.lt.s32.totalorder %s265, 8
        %p268 = pnand %p266, %p267
        %p269 = pneg %p268
        %p270 = scmp.gt.s32.totalorder %s265, 0
        %s271 = scalar_select %p270, %s265, 0
        %p272 = scmp.lt.s32.totalorder %s271, 7
        %s273 = scalar_select %p272, %s271, 7
        %s274 = smul.u32 %s273, 16
        %s275 = scalar_lea.vmem %s127, %s274 [#allocation2]
        %v276 = vld [vmem:[%s275] sm:$0xff]
        %s277 = scalar_select %p269, 1, 0
        %v278 = vstv %s277
        %vm279 = vcmp.eq.s32.totalorder %v278, 1
        %v280 = vsel %vm279, %v276, 0.0
        %v281 = vadd.f32 %v280, 0.0
        %v282 = vld [vmem:[%s241 + $0x8] sm:$0xff]
        %v283 = vsel %vm245, %v282, 0.0
        %v284 = vadd.f32 %v281, %v283
        %p285 = scmp.lt.s32.totalorder %s265, 7
        %s286 = scalar_select %p285, %s265, 7
        %s287 = ssub.s32 %s286, %s237
        %s288 = sadd.s32 %s287, 1
        %p289 = scmp.gt.s32.totalorder %s288, 1
        %s290 = scalar_select %p289, %s288, 1
        %s291 = scvt.s32.f32 %s290
        %v292 = vstv %s291
        %v293 = vrcp.pop %v292
        %s294 = vtos %v293
        %v295 = vstv %s294
        %v296 = vmul.f32 %v284, %v295
        %s297 = scalar_lea.vmem %s144, 24 [#allocation4]
        %298 = vst [vmem:[%s297] sm:$0xff] %v296
        %s299 = sadd.s32 %s150, 4
        %p300 = scmp.ge.s32.totalorder %s299, 0
        %p301 = scmp.lt.s32.totalorder %s299, 8
        %p302 = pnand %p300, %p301
        %p303 = pneg %p302
        %p304 = scmp.gt.s32.totalorder %s299, 0
        %s305 = scalar_select %p304, %s299, 0
        %p306 = scmp.lt.s32.totalorder %s305, 7
        %s307 = scalar_select %p306, %s305, 7
        %s308 = smul.u32 %s307, 16
        %s309 = scalar_lea.vmem %s127, %s308 [#allocation2]
        %v310 = vld [vmem:[%s309] sm:$0xff]
        %s311 = scalar_select %p303, 1, 0
        %v312 = vstv %s311
        %vm313 = vcmp.eq.s32.totalorder %v312, 1
        %v314 = vsel %vm313, %v310, 0.0
        %v315 = vadd.f32 %v314, 0.0
        %v316 = vld [vmem:[%s275 + $0x8] sm:$0xff]
        %v317 = vsel %vm279, %v316, 0.0
        %v318 = vadd.f32 %v315, %v317
        %p319 = scmp.lt.s32.totalorder %s299, 7
        %s320 = scalar_select %p319, %s299, 7
        %s321 = ssub.s32 %s320, %s271
        %s322 = sadd.s32 %s321, 1
        %p323 = scmp.gt.s32.totalorder %s322, 1
        %s324 = scalar_select %p323, %s322, 1
        %s325 = scvt.s32.f32 %s324
        %v326 = vstv %s325
        %v327 = vrcp.pop %v326
        %s328 = vtos %v327
        %v329 = vstv %s328
        %v330 = vmul.f32 %v318, %v329
        %s331 = scalar_lea.vmem %s144, 32 [#allocation4]
        %332 = vst [vmem:[%s331] sm:$0xff] %v330
        %s333 = sadd.s32 %s150, 5
        %p334 = scmp.ge.s32.totalorder %s333, 0
        %p335 = scmp.lt.s32.totalorder %s333, 8
        %p336 = pnand %p334, %p335
        %p337 = pneg %p336
        %p338 = scmp.gt.s32.totalorder %s333, 0
        %s339 = scalar_select %p338, %s333, 0
        %p340 = scmp.lt.s32.totalorder %s339, 7
        %s341 = scalar_select %p340, %s339, 7
        %s342 = smul.u32 %s341, 16
        %s343 = scalar_lea.vmem %s127, %s342 [#allocation2]
        %v344 = vld [vmem:[%s343] sm:$0xff]
        %s345 = scalar_select %p337, 1, 0
        %v346 = vstv %s345
        %vm347 = vcmp.eq.s32.totalorder %v346, 1
        %v348 = vsel %vm347, %v344, 0.0
        %v349 = vadd.f32 %v348, 0.0
        %v350 = vld [vmem:[%s309 + $0x8] sm:$0xff]
        %v351 = vsel %vm313, %v350, 0.0
        %v352 = vadd.f32 %v349, %v351
        %p353 = scmp.lt.s32.totalorder %s333, 7
        %s354 = scalar_select %p353, %s333, 7
        %s355 = ssub.s32 %s354, %s305
        %s356 = sadd.s32 %s355, 1
        %p357 = scmp.gt.s32.totalorder %s356, 1
        %s358 = scalar_select %p357, %s356, 1
        %s359 = scvt.s32.f32 %s358
        %v360 = vstv %s359
        %v361 = vrcp.pop %v360
        %s362 = vtos %v361
        %v363 = vstv %s362
        %v364 = vmul.f32 %v352, %v363
        %s365 = scalar_lea.vmem %s144, 40 [#allocation4]
        %366 = vst [vmem:[%s365] sm:$0xff] %v364
        %s367 = sadd.s32 %s150, 6
        %p368 = scmp.ge.s32.totalorder %s367, 0
        %p369 = scmp.lt.s32.totalorder %s367, 8
        %p370 = pnand %p368, %p369
        %p371 = pneg %p370
        %p372 = scmp.gt.s32.totalorder %s367, 0
        %s373 = scalar_select %p372, %s367, 0
        %p374 = scmp.lt.s32.totalorder %s373, 7
        %s375 = scalar_select %p374, %s373, 7
        %s376 = smul.u32 %s375, 16
        %s377 = scalar_lea.vmem %s127, %s376 [#allocation2]
        %v378 = vld [vmem:[%s377] sm:$0xff]
        %s379 = scalar_select %p371, 1, 0
        %v380 = vstv %s379
        %vm381 = vcmp.eq.s32.totalorder %v380, 1
        %v382 = vsel %vm381, %v378, 0.0
        %v383 = vadd.f32 %v382, 0.0
        %v384 = vld [vmem:[%s343 + $0x8] sm:$0xff]
        %v385 = vsel %vm347, %v384, 0.0
        %v386 = vadd.f32 %v383, %v385
        %p387 = scmp.lt.s32.totalorder %s367, 7
        %s388 = scalar_select %p387, %s367, 7
        %s389 = ssub.s32 %s388, %s339
        %s390 = sadd.s32 %s389, 1
        %p391 = scmp.gt.s32.totalorder %s390, 1
        %s392 = scalar_select %p391, %s390, 1
        %s393 = scvt.s32.f32 %s392
        %v394 = vstv %s393
        %v395 = vrcp.pop %v394
        %s396 = vtos %v395
        %v397 = vstv %s396
        %v398 = vmul.f32 %v386, %v397
        %s399 = scalar_lea.vmem %s144, 48 [#allocation4]
        %400 = vst [vmem:[%s399] sm:$0xff] %v398
        %s401 = sadd.s32 %s150, 7
        %p402 = scmp.ge.s32.totalorder %s401, 0
        %p403 = scmp.lt.s32.totalorder %s401, 8
        %p404 = pnand %p402, %p403
        %p405 = pneg %p404
        %p406 = scmp.gt.s32.totalorder %s401, 0
        %s407 = scalar_select %p406, %s401, 0
        %p408 = scmp.lt.s32.totalorder %s407, 7
        %s409 = scalar_select %p408, %s407, 7
        %s410 = smul.u32 %s409, 16
        %s411 = scalar_lea.vmem %s127, %s410 [#allocation2]
        %v412 = vld [vmem:[%s411] sm:$0xff]
        %s413 = scalar_select %p405, 1, 0
        %v414 = vstv %s413
        %vm415 = vcmp.eq.s32.totalorder %v414, 1
        %v416 = vsel %vm415, %v412, 0.0
        %v417 = vadd.f32 %v416, 0.0
        %v418 = vld [vmem:[%s377 + $0x8] sm:$0xff]
        %v419 = vsel %vm381, %v418, 0.0
        %v420 = vadd.f32 %v417, %v419
        %p421 = scmp.lt.s32.totalorder %s401, 7
        %s422 = scalar_select %p421, %s401, 7
        %s423 = ssub.s32 %s422, %s373
        %s424 = sadd.s32 %s423, 1
        %p425 = scmp.gt.s32.totalorder %s424, 1
        %s426 = scalar_select %p425, %s424, 1
        %s427 = scvt.s32.f32 %s426
        %v428 = vstv %s427
        %v429 = vrcp.pop %v428
        %s430 = vtos %v429
        %v431 = vstv %s430
        %v432 = vmul.f32 %v420, %v431
        %s433 = scalar_lea.vmem %s144, 56 [#allocation4]
        %434 = vst [vmem:[%s433] sm:$0xff] %v432
        %s435 = sand.u32 %s63, 1
        %s436 = sand.u32 %s63, 1
        %s437 = smul.addr %s436, 64
        %s438 = scalar_lea.vmem [#allocation4], %s437
        // Predicated region
        $region29: #{tpu_custom_call.1} parent=23 // pred_check
          %p439 = pneg %p73
        $region30: #{tpu_custom_call.1} parent=23 // pred_check_branch
          %441 = sbr.rel (%p439) target = $region32
        $region31: #{tpu_custom_call.1} parent=23 // pred_region
          %s442 = smul.u32 8, %s20
          %s443 = ssub.s32 9, %s442
          %p444 = scmp.lt.s32.totalorder %s443, 8
          %s445 = scalar_select %p444, %s443, 8
          %s446 = smul.u32 128, %s445
          %p447 = scmp.ne.s32.totalorder 0, %s446
          %s448 = smul.addr %s19, 9
          %s449 = sadd.s32 %s442, %s448
          %s450 = smul.addr %s449, 8
          %s451 = scalar_lea.vmem %s1, %s450
          // Predicated region
          $region33: #{tpu_custom_call.1} parent=31 // pred_check
            %p452 = pneg %p447
          $region34: #{tpu_custom_call.1} parent=31 // pred_check_branch
            %454 = sbr.rel (%p452) target = $region36
          $region35: #{tpu_custom_call.1} parent=31 // pred_region
            // Predicated region
            $region37: #{tpu_custom_call.1} parent=35 // pred_check
              _
            $region38: #{tpu_custom_call.1} parent=35 // pred_check_branch
              %456 = sbr.rel (0) target = $region40
            $region39: #{tpu_custom_call.1} parent=35 // pred_region
              // Predicated region
              $region59: #{tpu_custom_call.1} parent=39 // pred_check
                _
              $region60: #{tpu_custom_call.1} parent=39 // pred_check_branch
                %520 = sbr.rel (0) target = $region62
              $region61: #{tpu_custom_call.1} parent=39 // pred_region
                %s521 = sshrl.u32 %s445, 3
                // While loop
                $region63: #{tpu_custom_call.1} parent=61 // loop_pre_header
                  _
                $region64: #{tpu_custom_call.1} parent=61 // loop_header
                  %s523 = sphi 0, %s525
                  %p524 = scmp.ge.s32.totalorder %s523, %s521
                  %s528 = sphi 0, %s549
                  %s529 = sphi %s438, %s552
                  %s530 = sphi %s451, %s553
                $region65: #{tpu_custom_call.1} parent=61 // loop_header_branch
                  %527 = sbr.rel (%p524) target = $region69
                $region66: #{tpu_custom_call.1} parent=61 // loop_body
                  %v531 = vld [vmem:[%s529] sm:$0xff]
                  %532 = vst [vmem:[%s530] sm:$0xff] %v531
                  %v533 = vld [vmem:[%s529 + $0x8] sm:$0xff]
                  %534 = vst [vmem:[%s530 + $0x8] sm:$0xff] %v533
                  %v535 = vld [vmem:[%s529 + $0x10] sm:$0xff]
                  %536 = vst [vmem:[%s530 + $0x10] sm:$0xff] %v535
                  %v537 = vld [vmem:[%s529 + $0x18] sm:$0xff]
                  %538 = vst [vmem:[%s530 + $0x18] sm:$0xff] %v537
                  %v539 = vld [vmem:[%s529 + $0x20] sm:$0xff]
                  %540 = vst [vmem:[%s530 + $0x20] sm:$0xff] %v539
                  %v541 = vld [vmem:[%s529 + $0x28] sm:$0xff]
                  %542 = vst [vmem:[%s530 + $0x28] sm:$0xff] %v541
                  %v543 = vld [vmem:[%s529 + $0x30] sm:$0xff]
                  %544 = vst [vmem:[%s530 + $0x30] sm:$0xff] %v543
                  %v545 = vld [vmem:[%s529 + $0x38] sm:$0xff]
                  %546 = vst [vmem:[%s530 + $0x38] sm:$0xff] %v545
                  %s547 = sadd.s32 1, %s528
                  %p548 = scmp.ge.s32.totalorder %s547, %s521
                  %s549 = scalar_select %p548, 0, %s547
                  %s550 = smul.u32 %s549, 64
                  %s551 = smul.u32 %s549, 64
                  %s552 = scalar_lea.vmem %s438, %s550 [#allocation4]
                  %s553 = scalar_lea.vmem %s451, %s551
                $region67: #{tpu_custom_call.1} parent=61 // loop_footer
                  %s525 = sadd.s32 %s523, 1
                $region68: #{tpu_custom_call.1} parent=61 // loop_footer_branch
                  %522 = sbr.rel target = $region64
                $region69: #{tpu_custom_call.1} parent=61 // loop_exit
                  _
                %s554 = sshrl.u32 %s445, 3
                %s555 = sand.u32 %s445, 7
                %s556 = smul.u32 %s554, 8
                %s557 = smul.u32 8, %s556
                %s558 = scalar_lea.vmem %s438, %s557 [#allocation4]
                %s559 = smul.u32 8, %s556
                %s560 = scalar_lea.vmem %s451, %s559
                // While loop
                $region70: #{tpu_custom_call.1} parent=61 // loop_pre_header
                  _
                $region71: #{tpu_custom_call.1} parent=61 // loop_header
                  %s562 = sphi 0, %s564
                  %p563 = scmp.ge.s32.totalorder %s562, %s555
                  %s567 = sphi 0, %s574
                  %s568 = sphi %s558, %s577
                  %s569 = sphi %s560, %s578
                $region72: #{tpu_custom_call.1} parent=61 // loop_header_branch
                  %566 = sbr.rel (%p563) target = $region76
                $region73: #{tpu_custom_call.1} parent=61 // loop_body
                  %v570 = vld [vmem:[%s568] sm:$0xff]
                  %571 = vst [vmem:[%s569] sm:$0xff] %v570
                  %s572 = sadd.s32 1, %s567
                  %p573 = scmp.ge.s32.totalorder %s572, %s555
                  %s574 = scalar_select %p573, 0, %s572
                  %s575 = smul.u32 %s574, 8
                  %s576 = smul.u32 %s574, 8
                  %s577 = scalar_lea.vmem %s558, %s575 [#allocation4]
                  %s578 = scalar_lea.vmem %s560, %s576
                $region74: #{tpu_custom_call.1} parent=61 // loop_footer
                  %s564 = sadd.s32 %s562, 1
                $region75: #{tpu_custom_call.1} parent=61 // loop_footer_branch
                  %561 = sbr.rel target = $region71
                $region76: #{tpu_custom_call.1} parent=61 // loop_exit
                  _
              $region62: #{tpu_custom_call.1} parent=39 // pred_fallthru
                _
              // Predicated region
              $region77: #{tpu_custom_call.1} parent=39 // pred_check
                _
              $region78: #{tpu_custom_call.1} parent=39 // pred_check_branch
                %580 = sbr.rel target = $region80
              $region79: #{tpu_custom_call.1} parent=39 // pred_region
                _
              $region80: #{tpu_custom_call.1} parent=39 // pred_fallthru
                _
            $region40: #{tpu_custom_call.1} parent=35 // pred_fallthru
              _
            // Predicated region
            $region41: #{tpu_custom_call.1} parent=35 // pred_check
              _
            $region42: #{tpu_custom_call.1} parent=35 // pred_check_branch
              %458 = sbr.rel target = $region44
            $region43: #{tpu_custom_call.1} parent=35 // pred_region
              %s460 = ssub.s32 256, 1
              %s461 = sshrl.u32 %s445, 3
              // While loop
              $region45: #{tpu_custom_call.1} parent=43 // loop_pre_header
                _
              $region46: #{tpu_custom_call.1} parent=43 // loop_header
                %s463 = sphi 0, %s465
                %p464 = scmp.ge.s32.totalorder %s463, %s461
                %s468 = sphi 0, %s489
                %s469 = sphi %s438, %s492
                %s470 = sphi %s451, %s493
              $region47: #{tpu_custom_call.1} parent=43 // loop_header_branch
                %467 = sbr.rel (%p464) target = $region51
              $region48: #{tpu_custom_call.1} parent=43 // loop_body
                %v471 = vld [vmem:[%s469] sm:%s460]
                %472 = vst [vmem:[%s470] sm:%s460] %v471
                %v473 = vld [vmem:[%s469 + $0x8] sm:%s460]
                %474 = vst [vmem:[%s470 + $0x8] sm:%s460] %v473
                %v475 = vld [vmem:[%s469 + $0x10] sm:%s460]
                %476 = vst [vmem:[%s470 + $0x10] sm:%s460] %v475
                %v477 = vld [vmem:[%s469 + $0x18] sm:%s460]
                %478 = vst [vmem:[%s470 + $0x18] sm:%s460] %v477
                %v479 = vld [vmem:[%s469 + $0x20] sm:%s460]
                %480 = vst [vmem:[%s470 + $0x20] sm:%s460] %v479
                %v481 = vld [vmem:[%s469 + $0x28] sm:%s460]
                %482 = vst [vmem:[%s470 + $0x28] sm:%s460] %v481
                %v483 = vld [vmem:[%s469 + $0x30] sm:%s460]
                %484 = vst [vmem:[%s470 + $0x30] sm:%s460] %v483
                %v485 = vld [vmem:[%s469 + $0x38] sm:%s460]
                %486 = vst [vmem:[%s470 + $0x38] sm:%s460] %v485
                %s487 = sadd.s32 1, %s468
                %p488 = scmp.ge.s32.totalorder %s487, %s461
                %s489 = scalar_select %p488, 0, %s487
                %s490 = smul.u32 %s489, 64
                %s491 = smul.u32 %s489, 64
                %s492 = scalar_lea.vmem %s438, %s490 [#allocation4]
                %s493 = scalar_lea.vmem %s451, %s491
              $region49: #{tpu_custom_call.1} parent=43 // loop_footer
                %s465 = sadd.s32 %s463, 1
              $region50: #{tpu_custom_call.1} parent=43 // loop_footer_branch
                %462 = sbr.rel target = $region46
              $region51: #{tpu_custom_call.1} parent=43 // loop_exit
                _
              %s494 = sshrl.u32 %s445, 3
              %s495 = sand.u32 %s445, 7
              %s496 = smul.u32 %s494, 8
              %s497 = smul.u32 8, %s496
              %s498 = scalar_lea.vmem %s438, %s497 [#allocation4]
              %s499 = smul.u32 8, %s496
              %s500 = scalar_lea.vmem %s451, %s499
              // While loop
              $region52: #{tpu_custom_call.1} parent=43 // loop_pre_header
                _
              $region53: #{tpu_custom_call.1} parent=43 // loop_header
                %s502 = sphi 0, %s504
                %p503 = scmp.ge.s32.totalorder %s502, %s495
                %s507 = sphi 0, %s514
                %s508 = sphi %s498, %s517
                %s509 = sphi %s500, %s518
              $region54: #{tpu_custom_call.1} parent=43 // loop_header_branch
                %506 = sbr.rel (%p503) target = $region58
              $region55: #{tpu_custom_call.1} parent=43 // loop_body
                %v510 = vld [vmem:[%s508] sm:%s460]
                %511 = vst [vmem:[%s509] sm:%s460] %v510
                %s512 = sadd.s32 1, %s507
                %p513 = scmp.ge.s32.totalorder %s512, %s495
                %s514 = scalar_select %p513, 0, %s512
                %s515 = smul.u32 %s514, 8
                %s516 = smul.u32 %s514, 8
                %s517 = scalar_lea.vmem %s498, %s515 [#allocation4]
                %s518 = scalar_lea.vmem %s500, %s516
              $region56: #{tpu_custom_call.1} parent=43 // loop_footer
                %s504 = sadd.s32 %s502, 1
              $region57: #{tpu_custom_call.1} parent=43 // loop_footer_branch
                %501 = sbr.rel target = $region53
              $region58: #{tpu_custom_call.1} parent=43 // loop_exit
                _
            $region44: #{tpu_custom_call.1} parent=35 // pred_fallthru
              _
          $region36: #{tpu_custom_call.1} parent=31 // pred_fallthru
            _
          %581 = vnop
        $region32: #{tpu_custom_call.1} parent=23 // pred_fallthru
          _
      $region24: #{tpu_custom_call.1} parent=5 // pred_fallthru
        _
      %p582 = scmp.le.s32.totalorder 2, %s10
      // Predicated region
      $region81: #{tpu_custom_call.1} parent=5 // pred_check
        %p583 = pneg %p582
      $region82: #{tpu_custom_call.1} parent=5 // pred_check_branch
        %585 = sbr.rel (%p583) target = $region84
      $region83: #{tpu_custom_call.1} parent=5 // pred_region
        %s586 = ssub.s32 %s10, 2
        // Predicated region
        $region85: #{tpu_custom_call.1} parent=83 // pred_check
          %p587 = pneg %p79
        $region86: #{tpu_custom_call.1} parent=83 // pred_check_branch
          %589 = sbr.rel (%p587) target = $region88
        $region87: #{tpu_custom_call.1} parent=83 // pred_region
          %s590 = sand.u32 %s64, 1
          %s591 = sand.u32 %s64, 1
          %s592 = smul.addr %s591, 64
          %s593 = scalar_lea.vmem [#allocation4], %s592
        $region88: #{tpu_custom_call.1} parent=83 // pred_fallthru
          _
      $region84: #{tpu_custom_call.1} parent=5 // pred_fallthru
        _
    $region6: #{tpu_custom_call.1} parent=1 // loop_footer
      %s14 = sadd.s32 1, %s10
    $region7: #{tpu_custom_call.1} parent=1 // loop_footer_branch
      %9 = sbr.rel target = $region3
    $region8: #{tpu_custom_call.1} parent=1 // loop_exit
      _
    %594 = vsyncpa [#allocation3], 1
    %s595 = scalar_lea.sflag [#allocation3], 1
    %596 = vsyncpa %s595, 1

</llo_original>
